<compile_context>
chip_gen: v7x
topology: tpu7x:2x2x1
jax: 0.10.0
libtpu: 0.0.40
codegen_flags: <defaults>
</compile_context>

<pallas_src>
import jax
import jax.numpy as jnp
from jax.experimental import pallas as pl
from jax.experimental.pallas import tpu as pltpu

LANES = 128
SUBLANES = 8


def _round_up(a, b):
    return ((a + b - 1) // b) * b


def _fc1_relu_kernel(wb_ref, x_ref, o_ref):
    # wb_ref: SMEM (6,) f32 = [w1_0, w1_1, w1_2, b1_0, b1_1, b1_2]
    # x_ref : VMEM (tile_r, 128) f32   (batch laid out on lanes)
    # o_ref : VMEM (3, tile_r, 128) f32 (lane-dense output slab)
    for j in range(3):  # static unroll over the 3 output features
        o_ref[j, :, :] = jnp.maximum(x_ref[...] * wb_ref[j] + wb_ref[3 + j], 0.0)


def _fc1_relu_reference(x, w1, b1):
    return jnp.maximum(x @ w1.T + b1.reshape(1, -1), 0.0)


def net_forward(x, w1, b1, *, tile_rows=1024, min_pallas_batch=1 << 17,
                lane_dense_output=False):
    """relu(fc1(x)).

    x: (B, 1) f32, w1: (3, 1) f32 (PyTorch layout), b1: (3,) f32.
    Returns (B, 3) f32, or (3, B) f32 if lane_dense_output=True (no transpose).
    """
    B = x.shape[0]
    if B < min_pallas_batch:
        # Small/medium batch: custom-call dispatch + layout passes dominate;
        # let XLA emit a single fused elementwise kernel instead.
        ref = _fc1_relu_reference(x, w1, b1)
        return ref.T if lane_dense_output else ref

    # --- tiling over the lane-dense row axis ------------------------------
    r_need = pl.cdiv(B, LANES)
    # Split r_need as evenly as possible into <= tile_rows chunks; force >= 2
    # chunks when there are enough rows so megacore (v7x) can shard the grid.
    num_tiles = max(pl.cdiv(r_need, tile_rows),
                    2 if r_need >= 2 * SUBLANES else 1)
    tile_r = _round_up(pl.cdiv(r_need, num_tiles), SUBLANES)
    r_rows = max(r_need, tile_r)          # never let block dim exceed array dim
    n_elems = r_rows * LANES
    grid = (pl.cdiv(r_rows, tile_r),)     # edge block masked by Pallas, no pad

    # --- layout: flatten batch onto lanes, minimal padding ----------------
    x_flat = x.reshape(-1).astype(jnp.float32)
    if n_elems != B:
        # Pad only to the next 128-lane (or minimal-row) boundary; this is the
        # only extra input pass and covers <=127 (+<=7*128 corner-case) elems.
        # TODO(synk): fuse this pad into the pallas_call input DMA via
        # allow_input_fusion once that path is validated for prefetch specs.
        x_flat = jnp.pad(x_flat, (0, n_elems - B))
    xv = x_flat.reshape(r_rows, LANES)

    wb = jnp.concatenate([w1.reshape(3), b1.reshape(3)]).astype(jnp.float32)

    out = pl.pallas_call(
        _fc1_relu_kernel,
        out_shape=jax.ShapeDtypeStruct((3, r_rows, LANES), jnp.float32),
        grid_spec=pltpu.PrefetchScalarGridSpec(
            num_scalar_prefetch=1,
            grid=grid,
            in_specs=[
                pl.BlockSpec((tile_r, LANES), lambda i, wb_ref: (i, 0)),
            ],
            out_specs=pl.BlockSpec((3, tile_r, LANES),
                                   lambda i, wb_ref: (0, i, 0)),
        ),
        compiler_params=pltpu.CompilerParams(
            dimension_semantics=("parallel",)),
        cost_estimate=pl.CostEstimate(
            flops=9 * n_elems,                    # 3x (mul + add + max) / elem
            transcendentals=0,
            bytes_accessed=16 * n_elems,          # 4 B in + 12 B out per elem
        ),
    )(wb, xv)

    # Slice BEFORE any transpose so the copy covers only B columns.
    flat = out.reshape(3, n_elems)[:, :B]
    if lane_dense_output:
        return flat          # (3, B) lane-dense slab: zero-transpose contract
    return flat.T            # (B, 3) to match nn.Linear output layout


def init_params(key):
    """Deterministic init mimicking PyTorch nn.Linear default uniform(+-1/sqrt(fan_in))."""
    k1, k2, k3, k4 = jax.random.split(key, 4)
    # fc1: Linear(1, 3) -> weight (3, 1), bias (3,), bound = 1/sqrt(1) = 1
    w1 = jax.random.uniform(k1, (3, 1), jnp.float32, -1.0, 1.0)
    b1 = jax.random.uniform(k2, (3,), jnp.float32, -1.0, 1.0)
    # fc2: Linear(3, 1) -> defined but unused in forward(); kept for parity
    bound2 = 1.0 / jnp.sqrt(3.0)
    w2 = jax.random.uniform(k3, (1, 3), jnp.float32, -bound2, bound2)
    b2 = jax.random.uniform(k4, (1,), jnp.float32, -bound2, bound2)
    return w1, b1, w2, b2


if __name__ == "__main__":
    key = jax.random.PRNGKey(0)
    kx, kp = jax.random.split(key)
    w1, b1, w2, b2 = init_params(kp)

    # 1) Kernel path, lane-aligned batch (grid of 2 steps -> megacore-friendly).
    B = 2048
    x = jax.random.normal(kx, (B, 1), jnp.float32)
    out = jax.block_until_ready(net_forward(x, w1, b1, min_pallas_batch=1024))
    ref = _fc1_relu_reference(x, w1, b1)
    assert out.shape == (B, 3)
    assert jnp.allclose(out, ref, atol=1e-5), "mismatch (kernel path, aligned B)"

    # Lane-dense output contract (no transpose at all).
    out_ld = jax.block_until_ready(
        net_forward(x, w1, b1, min_pallas_batch=1024, lane_dense_output=True))
    assert out_ld.shape == (3, B)
    assert jnp.allclose(out_ld, ref.T, atol=1e-5), "mismatch (lane-dense output)"

    # 2) Kernel path, batch not a multiple of 128 (minimal pad) and a row count
    #    not divisible by the tile (Pallas masked edge block).
    for Bq in (2000, 2432):
        xq = jax.random.normal(kx, (Bq, 1), jnp.float32)
        outq = jax.block_until_ready(net_forward(xq, w1, b1, min_pallas_batch=1024))
        assert outq.shape == (Bq, 3)
        assert jnp.allclose(outq, _fc1_relu_reference(xq, w1, b1), atol=1e-5), \
            f"mismatch (kernel path, B={Bq})"

    # 3) Tiny batch -> fused-XLA fallback (kernel would be pure overhead).
    xs = jax.random.normal(kx, (8, 1), jnp.float32)
    outs = jax.block_until_ready(net_forward(xs, w1, b1))
    assert jnp.allclose(outs, _fc1_relu_reference(xs, w1, b1), atol=1e-5), \
        "mismatch (small B fallback)"

    print("KERNEL_OK")
</pallas_src>

<mosaic_0001>
module attributes {stable_mosaic.version = 11 : i64} {
  func.func @_fc1_relu_kernel(%arg0: i32, %arg1: memref<6xf32, #tpu.memory_space<smem>>, %arg2: memref<8x128xf32, #tpu.memory_space<vmem>>, %arg3: memref<3x8x128xf32, #tpu.memory_space<vmem>>) attributes {dimension_semantics = [#tpu.dimension_semantics<parallel>], iteration_bounds = array<i64: 2>, scalar_prefetch = 1 : i64, scratch_operands = 0 : i64, tpu.core_type = #tpu.core_type<tc>, window_params = [{transform_indices = @transform_0, window_bounds = array<i64: 8, 128>}, {transform_indices = @transform_1, window_bounds = array<i64: 3, 8, 128>}]} {
    %c0 = arith.constant 0 : index
    %c0_0 = arith.constant 0 : index
    %0 = vector.load %arg2[%c0, %c0_0] : memref<8x128xf32, #tpu.memory_space<vmem>>, vector<8x128xf32>
    %c0_1 = arith.constant 0 : index
    %1 = memref.load %arg1[%c0_1] : memref<6xf32, #tpu.memory_space<smem>>
    %2 = vector.broadcast %1 : f32 to vector<8x128xf32>
    %3 = arith.mulf %0, %2 : vector<8x128xf32>
    %c3 = arith.constant 3 : index
    %4 = memref.load %arg1[%c3] : memref<6xf32, #tpu.memory_space<smem>>
    %5 = vector.broadcast %4 : f32 to vector<8x128xf32>
    %6 = arith.addf %3, %5 : vector<8x128xf32>
    %cst = arith.constant 0.000000e+00 : f32
    %7 = vector.broadcast %cst : f32 to vector<8x128xf32>
    %8 = arith.maximumf %6, %7 : vector<8x128xf32>
    %c0_2 = arith.constant 0 : index
    %c0_3 = arith.constant 0 : index
    %c0_4 = arith.constant 0 : index
    %9 = vector.load %arg3[%c0_2, %c0_3, %c0_4] : memref<3x8x128xf32, #tpu.memory_space<vmem>>, vector<1x8x128xf32>
    %10 = vector.shape_cast %9 : vector<1x8x128xf32> to vector<8x128xf32>
    %11 = vector.shape_cast %8 : vector<8x128xf32> to vector<1x8x128xf32>
    tpu.vector_store %arg3[%c0_2, %c0_3, %c0_4], %11 {strides = array<i32>} : memref<3x8x128xf32, #tpu.memory_space<vmem>>, vector<1x8x128xf32>,
    %c0_5 = arith.constant 0 : index
    %c0_6 = arith.constant 0 : index
    %12 = vector.load %arg2[%c0_5, %c0_6] : memref<8x128xf32, #tpu.memory_space<vmem>>, vector<8x128xf32>
    %c1 = arith.constant 1 : index
    %13 = memref.load %arg1[%c1] : memref<6xf32, #tpu.memory_space<smem>>
    %14 = vector.broadcast %13 : f32 to vector<8x128xf32>
    %15 = arith.mulf %12, %14 : vector<8x128xf32>
    %c4 = arith.constant 4 : index
    %16 = memref.load %arg1[%c4] : memref<6xf32, #tpu.memory_space<smem>>
    %17 = vector.broadcast %16 : f32 to vector<8x128xf32>
    %18 = arith.addf %15, %17 : vector<8x128xf32>
    %cst_7 = arith.constant 0.000000e+00 : f32
    %19 = vector.broadcast %cst_7 : f32 to vector<8x128xf32>
    %20 = arith.maximumf %18, %19 : vector<8x128xf32>
    %c1_8 = arith.constant 1 : index
    %c0_9 = arith.constant 0 : index
    %c0_10 = arith.constant 0 : index
    %21 = vector.load %arg3[%c1_8, %c0_9, %c0_10] : memref<3x8x128xf32, #tpu.memory_space<vmem>>, vector<1x8x128xf32>
    %22 = vector.shape_cast %21 : vector<1x8x128xf32> to vector<8x128xf32>
    %23 = vector.shape_cast %20 : vector<8x128xf32> to vector<1x8x128xf32>
    tpu.vector_store %arg3[%c1_8, %c0_9, %c0_10], %23 {strides = array<i32>} : memref<3x8x128xf32, #tpu.memory_space<vmem>>, vector<1x8x128xf32>,
    %c0_11 = arith.constant 0 : index
    %c0_12 = arith.constant 0 : index
    %24 = vector.load %arg2[%c0_11, %c0_12] : memref<8x128xf32, #tpu.memory_space<vmem>>, vector<8x128xf32>
    %c2 = arith.constant 2 : index
    %25 = memref.load %arg1[%c2] : memref<6xf32, #tpu.memory_space<smem>>
    %26 = vector.broadcast %25 : f32 to vector<8x128xf32>
    %27 = arith.mulf %24, %26 : vector<8x128xf32>
    %c5 = arith.constant 5 : index
    %28 = memref.load %arg1[%c5] : memref<6xf32, #tpu.memory_space<smem>>
    %29 = vector.broadcast %28 : f32 to vector<8x128xf32>
    %30 = arith.addf %27, %29 : vector<8x128xf32>
    %cst_13 = arith.constant 0.000000e+00 : f32
    %31 = vector.broadcast %cst_13 : f32 to vector<8x128xf32>
    %32 = arith.maximumf %30, %31 : vector<8x128xf32>
    %c2_14 = arith.constant 2 : index
    %c0_15 = arith.constant 0 : index
    %c0_16 = arith.constant 0 : index
    %33 = vector.load %arg3[%c2_14, %c0_15, %c0_16] : memref<3x8x128xf32, #tpu.memory_space<vmem>>, vector<1x8x128xf32>
    %34 = vector.shape_cast %33 : vector<1x8x128xf32> to vector<8x128xf32>
    %35 = vector.shape_cast %32 : vector<8x128xf32> to vector<1x8x128xf32>
    tpu.vector_store %arg3[%c2_14, %c0_15, %c0_16], %35 {strides = array<i32>} : memref<3x8x128xf32, #tpu.memory_space<vmem>>, vector<1x8x128xf32>,
    return
  }
  func.func @transform_0(%arg0: i32, %arg1: memref<6xf32, #tpu.memory_space<smem>>) -> (i32, i32) {
    %c0_i32 = arith.constant 0 : i32
    %c0_i32_0 = arith.constant 0 : i32
    return %arg0, %c0_i32 : i32, i32
  }
  func.func @transform_1(%arg0: i32, %arg1: memref<6xf32, #tpu.memory_space<smem>>) -> (i32, i32, i32) {
    %c0_i32 = arith.constant 0 : i32
    %c0_i32_0 = arith.constant 0 : i32
    %c0_i32_1 = arith.constant 0 : i32
    return %c0_i32, %arg0, %c0_i32_0 : i32, i32, i32
  }
}

</mosaic_0001>

<llo_original>
// kernel: tpu_custom_call.1
$region0: #{tpu_custom_call.1}
  #allocation0 [shape = 'u32[]', space=smem, size = 0x4, offset = 0x4, fixed_abs, tag = 'smem constant byte address 0x4 - core index']
  #allocation1 [shape = 'u32[144,128]{1,0:T(1,128)}', space=vmem, size = 0x12000, scoped, tag = 'internal scratch']
  #allocation2 [shape = 's32[1]{0}', space=sflag, size = 0x4, scoped, tag = 'scoped memory for tpu_custom_call.1']
  #allocation3 [shape = 'u8[512]{0}', space=smem, size = 0x200, scoped, tag = 'prefetched SMEM operand 0']
  %s0 = inlined_call_operand.hbm [shape: f32[6], index: 0, kind: input, shape index: {}]
  %s1 = inlined_call_operand.hbm [shape: f32[16,128], index: 1, kind: input, shape index: {}]
  %s2 = inlined_call_operand.hbm [shape: f32[3,16,128], index: 2, kind: output, shape index: {}]
  %s3 = sld [smem:[#allocation0]]
  $region41: #{tpu_custom_call.1} parent=0
    _
  %s5 = ssub.s32 1, %s3
  %s6 = scalar_select 0, %s5, %s3
  %8 = dma.hbm_to_smem %s0, 16, [#allocation3], [#allocation2]
  %9 = dma.done [#allocation2], 16
  %10 = sfence
  $region1: #{tpu_custom_call.1} parent=0
    #allocation4 [shape = 'u8[8192]{0}', space=vmem, size = 0x2000, scoped, tag = 'input window, operand 1']
    #allocation5 [shape = 's32[2]{0}', space=sflag, size = 0x8, scoped, tag = 'scoped memory for tpu_custom_call.1']
    #allocation6 [shape = 's32[2]{0}', space=sflag, size = 0x8, scoped, tag = 'scoped memory for tpu_custom_call.1']
    #allocation7 [shape = 'u8[24576]{0}', space=vmem, size = 0x6000, scoped, tag = 'output window, operand 0']
    %11 = vsyncpa [#allocation5], 0
    %s12 = scalar_lea.sflag [#allocation5], 1
    %13 = vsyncpa %s12, 0
    %14 = vsyncpa [#allocation6], 0
    %s15 = scalar_lea.sflag [#allocation6], 1
    %16 = vsyncpa %s15, 0
    loop: start=0, step=1, limit=4
    $region2: #{tpu_custom_call.1} parent=1 // loop_pre_header
      _
    $region3: #{tpu_custom_call.1} parent=1 // loop_header
      %s18 = sphi 0, %s22
      %p19 = scmp.ge.s32.totalorder %s18, 4
      %s28 = sphi 0, %s30
      %s31 = sphi 0, %s28
      %s32 = sphi 0, %s31
      %s48 = sphi 0, %s32
      %s54 = sphi 0, %s56
      %s57 = sphi 0, %s54
      %s58 = sphi 0, %s57
      %s74 = sphi 0, %s58
    $region4: #{tpu_custom_call.1} parent=1 // loop_header_branch
      %21 = sbr.rel (%p19) target = $region8
    $region5: #{tpu_custom_call.1} parent=1 // loop_body
      %s23 = ssub.s32 %s18, 1
      %s24 = ssub.s32 %s18, 2
      %s25 = sadd.s32 %s18, 1
      %s26 = ssub.s32 %s18, %s25
      %p27 = scmp.eq.s32.totalorder %s26, 0
      %s29 = sadd.s32 %s28, 1
      %s30 = scalar_select %p27, %s28, %s29
      %p33 = pneg %p27
      %p34 = scmp.eq.s32.totalorder %s18, 1
      %p35 = por %p33, %p34
      %p36 = scmp.ne.s32.totalorder %s28, %s31
      %p37 = scmp.eq.s32.totalorder %s18, 0
      %p38 = por %p36, %p37
      %p39 = scmp.ne.s32.totalorder %s28, %s31
      %p40 = scmp.eq.s32.totalorder %s23, 1
      %p41 = por %p39, %p40
      %p42 = scmp.ne.s32.totalorder %s31, %s32
      %p43 = scmp.eq.s32.totalorder %s23, 0
      %p44 = por %p42, %p43
      %p45 = scmp.ne.s32.totalorder %s31, %s32
      %p46 = scmp.eq.s32.totalorder %s24, 1
      %p47 = por %p45, %p46
      %p49 = scmp.ne.s32.totalorder %s32, %s48
      %p50 = scmp.eq.s32.totalorder %s24, 0
      %p51 = por %p49, %p50
      %s52 = ssub.s32 %s18, %s25
      %p53 = scmp.eq.s32.totalorder %s52, 0
      %s55 = sadd.s32 %s54, 1
      %s56 = scalar_select %p53, %s54, %s55
      %p59 = pneg %p53
      %p60 = scmp.eq.s32.totalorder %s18, 1
      %p61 = por %p59, %p60
      %p62 = scmp.ne.s32.totalorder %s54, %s57
      %p63 = scmp.eq.s32.totalorder %s18, 0
      %p64 = por %p62, %p63
      %p65 = scmp.ne.s32.totalorder %s54, %s57
      %p66 = scmp.eq.s32.totalorder %s23, 1
      %p67 = por %p65, %p66
      %p68 = scmp.ne.s32.totalorder %s57, %s58
      %p69 = scmp.eq.s32.totalorder %s23, 0
      %p70 = por %p68, %p69
      %p71 = scmp.ne.s32.totalorder %s57, %s58
      %p72 = scmp.eq.s32.totalorder %s24, 1
      %p73 = por %p71, %p72
      %p75 = scmp.ne.s32.totalorder %s58, %s74
      %p76 = scmp.eq.s32.totalorder %s24, 0
      %p77 = por %p75, %p76
      %p78 = scmp.le.s32.totalorder 1, %s18
      %p79 = scmp.lt.s32.totalorder %s18, 3
      %p80 = pnand %p78, %p79
      %p81 = pneg %p80
      // Predicated region
      $region9: #{tpu_custom_call.1} parent=5 // pred_check
        _
      $region10: #{tpu_custom_call.1} parent=5 // pred_check_branch
        %83 = sbr.rel (%p80) target = $region12
      $region11: #{tpu_custom_call.1} parent=5 // pred_region
        %s84 = ssub.s32 %s18, 1
      $region12: #{tpu_custom_call.1} parent=5 // pred_fallthru
        _
      %p85 = scmp.lt.s32.totalorder %s18, 2
      // Predicated region
      $region13: #{tpu_custom_call.1} parent=5 // pred_check
        %p86 = pneg %p85
      $region14: #{tpu_custom_call.1} parent=5 // pred_check_branch
        %88 = sbr.rel (%p86) target = $region16
      $region15: #{tpu_custom_call.1} parent=5 // pred_region
        // Predicated region
        $region17: #{tpu_custom_call.1} parent=15 // pred_check
          %p89 = pneg %p38
        $region18: #{tpu_custom_call.1} parent=15 // pred_check_branch
          %91 = sbr.rel (%p89) target = $region20
        $region19: #{tpu_custom_call.1} parent=15 // pred_region
          %s92 = sand.u32 %s28, 1
          %s93 = scalar_lea.sflag [#allocation5], %s92
          %s94 = sand.u32 %s28, 1
          %s95 = smul.addr %s94, 8
          %s96 = scalar_lea.vmem [#allocation4], %s95
          %s98 = ssub.s32 128, 128
          %99 = vsyncadd %s93, %s98
          %s100 = smul.addr %s18, 128
          %s101 = scalar_lea.hbm %s1, %s100
          %s103 = sshll.u32 %s96, 4
          %s104 = int_to_ptr.vmem [resolvable:$true] %s103
          %106 = dma.hbm_to_vmem [thread:$0]  %s101, 128, %s104, %s93
        $region20: #{tpu_custom_call.1} parent=15 // pred_fallthru
          _
      $region16: #{tpu_custom_call.1} parent=5 // pred_fallthru
        _
      %p107 = scmp.le.s32.totalorder 1, %s18
      %p108 = scmp.lt.s32.totalorder %s18, 3
      %p109 = pnand %p107, %p108
      %p110 = pneg %p109
      // Predicated region
      $region21: #{tpu_custom_call.1} parent=5 // pred_check
        _
      $region22: #{tpu_custom_call.1} parent=5 // pred_check_branch
        %112 = sbr.rel (%p109) target = $region24
      $region23: #{tpu_custom_call.1} parent=5 // pred_region
        %s113 = ssub.s32 %s18, 1
        %s114 = sand.u32 %s31, 1
        %s115 = scalar_lea.sflag [#allocation5], %s114
        %s116 = sand.u32 %s31, 1
        %s117 = smul.addr %s116, 8
        %s118 = scalar_lea.vmem [#allocation4], %s117
        // Predicated region
        $region25: #{tpu_custom_call.1} parent=23 // pred_check
          %p119 = pneg %p44
        $region26: #{tpu_custom_call.1} parent=23 // pred_check_branch
          %121 = sbr.rel (%p119) target = $region28
        $region27: #{tpu_custom_call.1} parent=23 // pred_region
          %122 = dma.done %s115, 128
        $region28: #{tpu_custom_call.1} parent=23 // pred_fallthru
          _
        %s123 = sand.u32 %s31, 1
        %s124 = scalar_lea.sflag [#allocation5], %s123
        %s125 = sand.u32 %s31, 1
        %s126 = smul.addr %s125, 8
        %s127 = scalar_lea.vmem [#allocation4], %s126
        %p128 = pneg %p44
        %p129 = pneg %p41
        %p130 = pneg %p70
        %p131 = pneg %p67
        %s132 = sand.u32 %s57, 1
        %s133 = scalar_lea.sflag [#allocation6], %s132
        %s134 = sand.u32 %s57, 1
        %s135 = smul.addr %s134, 24
        %s136 = scalar_lea.vmem [#allocation7], %s135
        %v137 = vld [vmem:[%s118] sm:$0xff]
        %s138 = sld [smem:[#allocation3]]
        %v139 = vstv %s138
        %v140 = vmul.f32 %v137, %v139
        %s141 = sld [smem:[#allocation3 + $0x3]]
        %v142 = vstv %s141
        %v143 = vadd.f32 %v140, %v142
        %v144 = vmax.f32 %v143, 0.0
        %145 = vst [vmem:[%s136] sm:$0xff] %v144
        %v146 = vld [vmem:[%s118] sm:$0xff]
        %s147 = sld [smem:[#allocation3 + $0x1]]
        %v148 = vstv %s147
        %v149 = vmul.f32 %v146, %v148
        %s150 = sld [smem:[#allocation3 + $0x4]]
        %v151 = vstv %s150
        %v152 = vadd.f32 %v149, %v151
        %v153 = vmax.f32 %v152, 0.0
        %s154 = scalar_lea.vmem %s136, 8 [#allocation7]
        %155 = vst [vmem:[%s154] sm:$0xff] %v153
        %v156 = vld [vmem:[%s118] sm:$0xff]
        %s157 = sld [smem:[#allocation3 + $0x2]]
        %v158 = vstv %s157
        %v159 = vmul.f32 %v156, %v158
        %s160 = sld [smem:[#allocation3 + $0x5]]
        %v161 = vstv %s160
        %v162 = vadd.f32 %v159, %v161
        %v163 = vmax.f32 %v162, 0.0
        %s164 = scalar_lea.vmem %s136, 16 [#allocation7]
        %165 = vst [vmem:[%s164] sm:$0xff] %v163
        %s166 = sand.u32 %s57, 1
        %s167 = scalar_lea.sflag [#allocation6], %s166
        %s168 = sand.u32 %s57, 1
        %s169 = smul.addr %s168, 24
        %s170 = scalar_lea.vmem [#allocation7], %s169
        // Predicated region
        $region29: #{tpu_custom_call.1} parent=23 // pred_check
          %p171 = pneg %p67
        $region30: #{tpu_custom_call.1} parent=23 // pred_check_branch
          %173 = sbr.rel (%p171) target = $region32
        $region31: #{tpu_custom_call.1} parent=23 // pred_region
          %s175 = ssub.s32 384, 384
          %176 = vsyncadd %s167, %s175
          %s177 = smul.addr %s23, 128
          %s178 = scalar_lea.hbm %s2, %s177
          %s179 = sshll.u32 %s170, 4
          %s180 = int_to_ptr.vmem [resolvable:$true] %s179
          %185 = dma.vmem_to_hbm [thread:$0]  %s180, 384, %s178, %s167, 128, 256, 8
        $region32: #{tpu_custom_call.1} parent=23 // pred_fallthru
          _
      $region24: #{tpu_custom_call.1} parent=5 // pred_fallthru
        _
      %p186 = scmp.le.s32.totalorder 2, %s18
      // Predicated region
      $region33: #{tpu_custom_call.1} parent=5 // pred_check
        %p187 = pneg %p186
      $region34: #{tpu_custom_call.1} parent=5 // pred_check_branch
        %189 = sbr.rel (%p187) target = $region36
      $region35: #{tpu_custom_call.1} parent=5 // pred_region
        %s190 = ssub.s32 %s18, 2
        // Predicated region
        $region37: #{tpu_custom_call.1} parent=35 // pred_check
          %p191 = pneg %p73
        $region38: #{tpu_custom_call.1} parent=35 // pred_check_branch
          %193 = sbr.rel (%p191) target = $region40
        $region39: #{tpu_custom_call.1} parent=35 // pred_region
          %s194 = sand.u32 %s58, 1
          %s195 = scalar_lea.sflag [#allocation6], %s194
          %s196 = sand.u32 %s58, 1
          %s197 = smul.addr %s196, 24
          %s198 = scalar_lea.vmem [#allocation7], %s197
          %199 = dma.done %s195, 384
        $region40: #{tpu_custom_call.1} parent=35 // pred_fallthru
          _
      $region36: #{tpu_custom_call.1} parent=5 // pred_fallthru
        _
    $region6: #{tpu_custom_call.1} parent=1 // loop_footer
      %s22 = sadd.s32 1, %s18
    $region7: #{tpu_custom_call.1} parent=1 // loop_footer_branch
      %17 = sbr.rel target = $region3
    $region8: #{tpu_custom_call.1} parent=1 // loop_exit
      _
    %200 = vsyncpa [#allocation5], 1
    %s201 = scalar_lea.sflag [#allocation5], 1
    %202 = vsyncpa %s201, 1
    %203 = vsyncpa [#allocation6], 1
    %s204 = scalar_lea.sflag [#allocation6], 1
    %205 = vsyncpa %s204, 1

</llo_original>
